<compile_context>
chip_gen: v5e
topology: v5e:2x2
jax: 0.10.0
libtpu: 0.0.40
codegen_flags: <defaults>
</compile_context>

<pallas_src>
import functools

import jax
import jax.numpy as jnp
from jax import lax
from jax.experimental import pallas as pl
from jax.experimental.pallas import tpu as pltpu


def _round_up(n, m):
    return ((n + m - 1) // m) * m


def _bf16_epilogue_default():
    """Use a bf16 elementwise epilogue only where the VPU is bf16-native."""
    try:
        kind = jax.devices()[0].device_kind.lower()
    except Exception:
        return True
    # v2-v5 TPUs have no bf16 VALU; keep the epilogue in f32 there.
    return not any(t in kind for t in ("v2", "v3", "v4", "v5"))


def mlp_kernel(x_ref, w1_ref, b1_ref, w2_ref, b2_ref, w3_ref, b3_ref, o_ref,
               *, epi_dtype):
    # Cast x to bf16 in-kernel (no separate wrapper-side HBM pass).
    xb = x_ref[...].astype(jnp.bfloat16)

    # Layer 1: (TB, D) @ (D, H1p), f32 accumulate.  K=D left unpadded.
    h1 = jnp.dot(xb, w1_ref[...], preferred_element_type=jnp.float32)
    # Bias + ReLU epilogue in bf16 on v6e/v7x, f32 on v5e; feed bf16 to MXU.
    h1 = jnp.maximum(h1.astype(epi_dtype) + b1_ref[...], 0).astype(jnp.bfloat16)

    # Layer 2: (TB, H1p) @ (H1p, H2p), f32 accumulate.
    h2 = jnp.dot(h1, w2_ref[...], preferred_element_type=jnp.float32)
    h2 = jnp.maximum(h2.astype(epi_dtype) + b2_ref[...], 0).astype(jnp.bfloat16)

    # Output layer (out_features=1) on the MXU, transposed orientation:
    # (1, H2p) x (TB, H2p) contracting H2p -> lane-dense (1, TB) row.
    out_row = lax.dot_general(
        w3_ref[...], h2,
        dimension_numbers=(((1,), (1,)), ((), ())),
        preferred_element_type=jnp.float32)
    o_ref[...] = out_row + b3_ref[...]


def mlp_forward(x, params, *, tb_max=2048, min_grid_steps=2, bf16_epilogue=None):
    """Fused MLP forward. x: (B, D) float32. Returns (B,) float32."""
    w1, b1, w2, b2, w3, b3 = params
    B, D = x.shape
    H1, H2 = w1.shape[1], w2.shape[1]

    H1p = _round_up(H1, 128)   # 150 -> 256
    H2p = _round_up(H2, 128)   # 75  -> 128

    if bf16_epilogue is None:
        bf16_epilogue = _bf16_epilogue_default()
    epi = jnp.bfloat16 if bf16_epilogue else jnp.float32

    # Batch tile: aim for >= min_grid_steps grid steps (megacore sharding on
    # v7x; DMA/compute overlap everywhere).  VMEM note: the binding consumer
    # as TB grows is the f32 h1 temporary (TB*H1p*4 B) + its bf16 copy + h2,
    # plus the double-buffered x tile (2*TB*D*4 B); TB=2048 keeps all of this
    # well inside the 32 MiB default scoped VMEM on every generation
    # (v5e/v6e, 128 MiB physical, can take tb_max 2-4x larger).
    TB = max(8, min(tb_max, _round_up(pl.cdiv(B, min_grid_steps), 8)))
    n_tiles = pl.cdiv(B, TB)

    # Only the tiny weights/biases are zero-padded (numerically exact);
    # x is passed through untouched.
    w1p = jnp.zeros((D, H1p), jnp.bfloat16).at[:, :H1].set(w1.astype(jnp.bfloat16))
    b1p = jnp.zeros((1, H1p), epi).at[:, :H1].set(b1.astype(epi))
    w2p = jnp.zeros((H1p, H2p), jnp.bfloat16).at[:H1, :H2].set(w2.astype(jnp.bfloat16))
    b2p = jnp.zeros((1, H2p), epi).at[:, :H2].set(b2.astype(epi))
    w3p = jnp.zeros((1, H2p), jnp.bfloat16).at[:, :H2].set(
        w3[:, 0].astype(jnp.bfloat16)[None, :])
    b3p = b3.reshape(1, 1).astype(jnp.float32)

    const = lambda a: pl.BlockSpec(a.shape, lambda i: (0,) * a.ndim)

    flops = 2 * B * (D * H1p + H1p * H2p + H2p)
    bytes_accessed = (x.size + B) * 4 + (w1p.size + w2p.size + w3p.size) * 2 \
        + (b1p.size + b2p.size) * b1p.dtype.itemsize + 4

    out2d = pl.pallas_call(
        functools.partial(mlp_kernel, epi_dtype=epi),
        out_shape=jax.ShapeDtypeStruct((n_tiles, TB), jnp.float32),
        grid=(n_tiles,),
        in_specs=[
            # x tiled over batch; full-extent (unpadded) D; ragged last block
            # is handled by Pallas.  If the x DMA shows up exposed on a
            # profile, raise depth with pipeline_mode=pl.Buffered(3).
            pl.BlockSpec((TB, D), lambda i: (i, 0)),
            const(w1p), const(b1p),        # weights/biases VMEM-resident
            const(w2p), const(b2p),
            const(w3p), const(b3p),
        ],
        # Lane-dense output: one (1, TB) row per tile.
        out_specs=pl.BlockSpec((1, TB), lambda i: (i, 0)),
        compiler_params=pltpu.CompilerParams(
            dimension_semantics=("parallel",)),
        cost_estimate=pl.CostEstimate(
            flops=flops, transcendentals=0, bytes_accessed=bytes_accessed),
    )(x.astype(jnp.float32), w1p, b1p, w2p, b2p, w3p, b3p)

    # matches PyTorch output.squeeze(1); drop ragged-tile padding
    return out2d.reshape(-1)[:B]


def init_params(key, input_dim, hidden_dims=(150, 75)):
    """Deterministic PyTorch-style init: U(-1/sqrt(fan_in), 1/sqrt(fan_in))."""
    dims = [input_dim, *hidden_dims, 1]
    params = []
    for i in range(len(dims) - 1):
        fan_in, fan_out = dims[i], dims[i + 1]
        key, kw, kb = jax.random.split(key, 3)
        bound = 1.0 / jnp.sqrt(jnp.float32(fan_in))
        # stored as (in, out) so kernel does x @ W
        w = jax.random.uniform(kw, (fan_in, fan_out), jnp.float32, -bound, bound)
        b = jax.random.uniform(kb, (1, fan_out), jnp.float32, -bound, bound)
        params.extend([w, b])
    return tuple(params)


def reference_forward(x, params):
    w1, b1, w2, b2, w3, b3 = params
    h1 = jnp.maximum(x @ w1 + b1, 0.0)
    h2 = jnp.maximum(h1 @ w2 + b2, 0.0)
    return (h2 @ w3 + b3)[:, 0]


if __name__ == "__main__":
    batch, input_dim = 8, 32
    key = jax.random.PRNGKey(0)
    kx, kp = jax.random.split(key)

    x = jax.random.normal(kx, (batch, input_dim), jnp.float32)
    params = init_params(kp, input_dim)

    out = jax.block_until_ready(mlp_forward(x, params))
    ref = reference_forward(x, params)

    assert out.shape == (batch,), out.shape
    # bf16 MXU operands with f32 accumulation -> looser tolerance vs f32 ref.
    # TODO(synk): offer an all-f32-operand path if bit-parity with PyTorch is required.
    assert jnp.allclose(out, ref, atol=2e-2, rtol=2e-2), "mismatch vs f32 reference"

    print("KERNEL_OK")
</pallas_src>

<mosaic_0001>
module attributes {stable_mosaic.version = 11 : i64} {
  func.func @mlp_kernel(%arg0: i32, %arg1: memref<8x32xf32, #tpu.memory_space<vmem>>, %arg2: memref<32x256xbf16, #tpu.memory_space<vmem>>, %arg3: memref<1x256xbf16, #tpu.memory_space<vmem>>, %arg4: memref<256x128xbf16, #tpu.memory_space<vmem>>, %arg5: memref<1x128xbf16, #tpu.memory_space<vmem>>, %arg6: memref<1x128xbf16, #tpu.memory_space<vmem>>, %arg7: memref<1x1xf32, #tpu.memory_space<vmem>>, %arg8: memref<1x8xf32, #tpu.memory_space<vmem>>) attributes {dimension_semantics = [#tpu.dimension_semantics<parallel>], iteration_bounds = array<i64: 1>, scalar_prefetch = 0 : i64, scratch_operands = 0 : i64, tpu.core_type = #tpu.core_type<tc>, window_params = [{transform_indices = @transform_0, window_bounds = array<i64: 8, 32>}, {pipeline_mode = #tpu.pipeline_mode<synchronous>, transform_indices = @transform_1, window_bounds = array<i64: 32, 256>}, {pipeline_mode = #tpu.pipeline_mode<synchronous>, transform_indices = @transform_2, window_bounds = array<i64: 1, 256>}, {pipeline_mode = #tpu.pipeline_mode<synchronous>, transform_indices = @transform_3, window_bounds = array<i64: 256, 128>}, {pipeline_mode = #tpu.pipeline_mode<synchronous>, transform_indices = @transform_4, window_bounds = array<i64: 1, 128>}, {pipeline_mode = #tpu.pipeline_mode<synchronous>, transform_indices = @transform_5, window_bounds = array<i64: 1, 128>}, {pipeline_mode = #tpu.pipeline_mode<synchronous>, transform_indices = @transform_6, window_bounds = array<i64: 1, 1>}, {transform_indices = @transform_7, window_bounds = array<i64: 1, 8>}]} {
    %c0 = arith.constant 0 : index
    %c0_0 = arith.constant 0 : index
    %0 = vector.load %arg1[%c0, %c0_0] : memref<8x32xf32, #tpu.memory_space<vmem>>, vector<8x32xf32>
    %1 = arith.truncf %0 : vector<8x32xf32> to vector<8x32xbf16>
    %c0_1 = arith.constant 0 : index
    %c0_2 = arith.constant 0 : index
    %2 = vector.load %arg2[%c0_1, %c0_2] : memref<32x256xbf16, #tpu.memory_space<vmem>>, vector<32x256xbf16>
    %cst = arith.constant dense<0.000000e+00> : vector<8x256xf32>
    %3 = tpu.matmul %1, %2, %cst {dimension_numbers = #tpu.dot_dimension_numbers<[1], [0], [0], [1], [0, 0, 1, 1], [], []>} : vector<8x32xbf16>, vector<32x256xbf16>, vector<8x256xf32> -> vector<8x256xf32>
    %4 = arith.truncf %3 : vector<8x256xf32> to vector<8x256xbf16>
    %c0_3 = arith.constant 0 : index
    %c0_4 = arith.constant 0 : index
    %5 = vector.load %arg3[%c0_3, %c0_4] : memref<1x256xbf16, #tpu.memory_space<vmem>>, vector<1x256xbf16>
    %6 = vector.broadcast %5 : vector<1x256xbf16> to vector<8x256xbf16>
    %7 = arith.addf %4, %6 : vector<8x256xbf16>
    %cst_5 = arith.constant 0.000000e+00 : bf16
    %8 = vector.broadcast %cst_5 : bf16 to vector<8x256xbf16>
    %9 = arith.maximumf %7, %8 : vector<8x256xbf16>
    %c0_6 = arith.constant 0 : index
    %c0_7 = arith.constant 0 : index
    %10 = vector.load %arg4[%c0_6, %c0_7] : memref<256x128xbf16, #tpu.memory_space<vmem>>, vector<256x128xbf16>
    %cst_8 = arith.constant dense<0.000000e+00> : vector<8x128xf32>
    %11 = tpu.matmul %9, %10, %cst_8 {dimension_numbers = #tpu.dot_dimension_numbers<[1], [0], [0], [1], [0, 0, 1, 1], [], []>} : vector<8x256xbf16>, vector<256x128xbf16>, vector<8x128xf32> -> vector<8x128xf32>
    %12 = arith.truncf %11 : vector<8x128xf32> to vector<8x128xbf16>
    %c0_9 = arith.constant 0 : index
    %c0_10 = arith.constant 0 : index
    %13 = vector.load %arg5[%c0_9, %c0_10] : memref<1x128xbf16, #tpu.memory_space<vmem>>, vector<1x128xbf16>
    %14 = vector.broadcast %13 : vector<1x128xbf16> to vector<8x128xbf16>
    %15 = arith.addf %12, %14 : vector<8x128xbf16>
    %cst_11 = arith.constant 0.000000e+00 : bf16
    %16 = vector.broadcast %cst_11 : bf16 to vector<8x128xbf16>
    %17 = arith.maximumf %15, %16 : vector<8x128xbf16>
    %c0_12 = arith.constant 0 : index
    %c0_13 = arith.constant 0 : index
    %18 = vector.load %arg6[%c0_12, %c0_13] : memref<1x128xbf16, #tpu.memory_space<vmem>>, vector<1x128xbf16>
    %cst_14 = arith.constant dense<0.000000e+00> : vector<1x8xf32>
    %19 = tpu.matmul %18, %17, %cst_14 {dimension_numbers = #tpu.dot_dimension_numbers<[1], [1], [0], [0], [0, 0, 1, 0], [], []>} : vector<1x128xbf16>, vector<8x128xbf16>, vector<1x8xf32> -> vector<1x8xf32>
    %c0_15 = arith.constant 0 : index
    %c0_16 = arith.constant 0 : index
    %20 = vector.load %arg7[%c0_15, %c0_16] : memref<1x1xf32, #tpu.memory_space<vmem>>, vector<1x1xf32>
    %21 = vector.broadcast %20 : vector<1x1xf32> to vector<1x8xf32>
    %22 = arith.addf %19, %21 : vector<1x8xf32>
    %c0_17 = arith.constant 0 : index
    %c0_18 = arith.constant 0 : index
    %23 = vector.load %arg8[%c0_17, %c0_18] : memref<1x8xf32, #tpu.memory_space<vmem>>, vector<1x8xf32>
    tpu.vector_store %arg8[%c0_17, %c0_18], %22 {strides = array<i32>} : memref<1x8xf32, #tpu.memory_space<vmem>>, vector<1x8xf32>,
    return
  }
  func.func @transform_0(%arg0: i32) -> (i32, i32) {
    %c0_i32 = arith.constant 0 : i32
    %c0_i32_0 = arith.constant 0 : i32
    return %arg0, %c0_i32 : i32, i32
  }
  func.func @transform_1(%arg0: i32) -> (i32, i32) {
    %c0_i32 = arith.constant 0 : i32
    %c0_i32_0 = arith.constant 0 : i32
    %c0_i32_1 = arith.constant 0 : i32
    return %c0_i32, %c0_i32_0 : i32, i32
  }
  func.func @transform_2(%arg0: i32) -> (i32, i32) {
    %c0_i32 = arith.constant 0 : i32
    %c0_i32_0 = arith.constant 0 : i32
    %c0_i32_1 = arith.constant 0 : i32
    return %c0_i32, %c0_i32_0 : i32, i32
  }
  func.func @transform_3(%arg0: i32) -> (i32, i32) {
    %c0_i32 = arith.constant 0 : i32
    %c0_i32_0 = arith.constant 0 : i32
    %c0_i32_1 = arith.constant 0 : i32
    return %c0_i32, %c0_i32_0 : i32, i32
  }
  func.func @transform_4(%arg0: i32) -> (i32, i32) {
    %c0_i32 = arith.constant 0 : i32
    %c0_i32_0 = arith.constant 0 : i32
    %c0_i32_1 = arith.constant 0 : i32
    return %c0_i32, %c0_i32_0 : i32, i32
  }
  func.func @transform_5(%arg0: i32) -> (i32, i32) {
    %c0_i32 = arith.constant 0 : i32
    %c0_i32_0 = arith.constant 0 : i32
    %c0_i32_1 = arith.constant 0 : i32
    return %c0_i32, %c0_i32_0 : i32, i32
  }
  func.func @transform_6(%arg0: i32) -> (i32, i32) {
    %c0_i32 = arith.constant 0 : i32
    %c0_i32_0 = arith.constant 0 : i32
    %c0_i32_1 = arith.constant 0 : i32
    return %c0_i32, %c0_i32_0 : i32, i32
  }
  func.func @transform_7(%arg0: i32) -> (i32, i32) {
    %c0_i32 = arith.constant 0 : i32
    %c0_i32_0 = arith.constant 0 : i32
    return %arg0, %c0_i32 : i32, i32
  }
}

</mosaic_0001>

<llo_original>
// kernel: tpu_custom_call.1
$region0: #{tpu_custom_call.1}
  #allocation0 [shape = 'u32[]', space=smem, size = 0x4, offset = 0x4, fixed_abs, tag = 'smem constant byte address 0x4 - core index']
  #allocation1 [shape = 'u32[72,128]{1,0:T(1,128)}', space=vmem, size = 0x9000, scoped, tag = 'internal scratch']
  #allocation2 [shape = 'f32[1,1]{1,0:T(1,128)S(1)}', space=vmem, size = 0x200, scoped, tag = 'scoped memory for tpu_custom_call.1']
  %s0 = inlined_call_operand.hbm [shape: f32[8,32], index: 0, kind: input, shape index: {}]
  %s1 = inlined_call_operand.hbm [shape: bf16[32,256], index: 1, kind: input, shape index: {}]
  %s2 = inlined_call_operand.vmem [shape: bf16[1,256], index: 2, kind: input, shape index: {}]
  %s3 = inlined_call_operand.hbm [shape: bf16[256,128], index: 3, kind: input, shape index: {}]
  %s4 = inlined_call_operand.vmem [shape: bf16[1,128], index: 4, kind: input, shape index: {}]
  %s5 = inlined_call_operand.vmem [shape: bf16[1,128], index: 5, kind: input, shape index: {}]
  %s6 = inlined_call_operand.<no memory space> [shape: f32[1,1], index: 6, kind: input, shape index: {}]
  %s7 = inlined_call_operand.hbm [shape: f32[1,8], index: 7, kind: output, shape index: {}]
  %s8 = sld [smem:[#allocation0]]
  $region50: #{tpu_custom_call.1} parent=0
    _
  %s10 = ssub.s32 1, %s8
  %s11 = scalar_select 0, %s10, %s8
  %v12 = vstv %s6
  %13 = vst [vmem:[#allocation2] sm:$0x1] %v12
  $region1: #{tpu_custom_call.1} parent=0
    #allocation3 [shape = 'u8[4096]{0}', space=vmem, size = 0x1000, scoped, tag = 'input window, operand 0, single buffered']
    #allocation4 [shape = 's32[1]{0}', space=sflag, size = 0x4, scoped, tag = 'scoped memory for tpu_custom_call.1']
    #allocation5 [shape = 's32[1]{0}', space=sflag, size = 0x4, scoped, tag = 'scoped memory for tpu_custom_call.1']
    #allocation6 [shape = 'u8[16384]{0}', space=vmem, size = 0x4000, scoped, tag = 'input window, operand 1, single buffered']
    #allocation7 [shape = 's32[1]{0}', space=sflag, size = 0x4, scoped, tag = 'scoped memory for tpu_custom_call.1']
    #allocation8 [shape = 'u8[65536]{0}', space=vmem, size = 0x10000, scoped, tag = 'input window, operand 3, single buffered']
    #allocation9 [shape = 'u8[512]{0}', space=vmem, size = 0x400, scoped, tag = 'output window, operand 0, single buffered']
    %14 = vsyncpa [#allocation4], 0
    %15 = vsyncpa [#allocation7], 0
    %16 = vsyncpa [#allocation5], 0
    // Predicated region
    $region2: #{tpu_custom_call.1} parent=1 // pred_check
      _
    $region3: #{tpu_custom_call.1} parent=1 // pred_check_branch
      %18 = sbr.rel (0) target = $region5
    $region4: #{tpu_custom_call.1} parent=1 // pred_region
      %20 = vsyncadd [#allocation4], 0
      %s22 = sshll.u32 %s0, 4
      %s23 = int_to_ptr.hbm [resolvable:$true] %s22
      %s24 = sshll.u32 [#allocation3], 4
      %s25 = int_to_ptr.vmem [resolvable:$true] %s24
      %27 = dma.hbm_to_vmem [thread:$0]  %s23, 128, %s25, [#allocation4]
    $region5: #{tpu_custom_call.1} parent=1 // pred_fallthru
      _
    // Predicated region
    $region6: #{tpu_custom_call.1} parent=1 // pred_check
      _
    $region7: #{tpu_custom_call.1} parent=1 // pred_check_branch
      %29 = sbr.rel (0) target = $region9
    $region8: #{tpu_custom_call.1} parent=1 // pred_region
      %31 = vsyncadd [#allocation7], 0
      %s32 = sshll.u32 %s1, 4
      %s33 = int_to_ptr.hbm [resolvable:$true] %s32
      %s34 = sshll.u32 [#allocation6], 4
      %s35 = int_to_ptr.vmem [resolvable:$true] %s34
      %40 = dma.hbm_to_vmem [thread:$0]  %s33, 512, %s35, [#allocation7], 128, 128, 8
    $region9: #{tpu_custom_call.1} parent=1 // pred_fallthru
      _
    // Predicated region
    $region10: #{tpu_custom_call.1} parent=1 // pred_check
      _
    $region11: #{tpu_custom_call.1} parent=1 // pred_check_branch
      %42 = sbr.rel (0) target = $region13
    $region12: #{tpu_custom_call.1} parent=1 // pred_region
      _
    $region13: #{tpu_custom_call.1} parent=1 // pred_fallthru
      _
    // Predicated region
    $region14: #{tpu_custom_call.1} parent=1 // pred_check
      _
    $region15: #{tpu_custom_call.1} parent=1 // pred_check_branch
      %44 = sbr.rel (0) target = $region17
    $region16: #{tpu_custom_call.1} parent=1 // pred_region
      %46 = vsyncadd [#allocation7], 0
      %s47 = sshll.u32 %s3, 4
      %s48 = int_to_ptr.hbm [resolvable:$true] %s47
      %s49 = sshll.u32 [#allocation8], 4
      %s50 = int_to_ptr.vmem [resolvable:$true] %s49
      %55 = dma.hbm_to_vmem [thread:$0]  %s48, 2048, %s50, [#allocation7], 64, 64, 4
    $region17: #{tpu_custom_call.1} parent=1 // pred_fallthru
      _
    // Predicated region
    $region18: #{tpu_custom_call.1} parent=1 // pred_check
      _
    $region19: #{tpu_custom_call.1} parent=1 // pred_check_branch
      %57 = sbr.rel (0) target = $region21
    $region20: #{tpu_custom_call.1} parent=1 // pred_region
      _
    $region21: #{tpu_custom_call.1} parent=1 // pred_fallthru
      _
    // Predicated region
    $region22: #{tpu_custom_call.1} parent=1 // pred_check
      _
    $region23: #{tpu_custom_call.1} parent=1 // pred_check_branch
      %59 = sbr.rel (0) target = $region25
    $region24: #{tpu_custom_call.1} parent=1 // pred_region
      _
    $region25: #{tpu_custom_call.1} parent=1 // pred_fallthru
      _
    // Predicated region
    $region26: #{tpu_custom_call.1} parent=1 // pred_check
      _
    $region27: #{tpu_custom_call.1} parent=1 // pred_check_branch
      %61 = sbr.rel (0) target = $region29
    $region28: #{tpu_custom_call.1} parent=1 // pred_region
      _
    $region29: #{tpu_custom_call.1} parent=1 // pred_fallthru
      _
    // Predicated region
    $region30: #{tpu_custom_call.1} parent=1 // pred_check
      _
    $region31: #{tpu_custom_call.1} parent=1 // pred_check_branch
      %63 = sbr.rel (0) target = $region33
    $region32: #{tpu_custom_call.1} parent=1 // pred_region
      %65 = dma.done [#allocation4], 128
    $region33: #{tpu_custom_call.1} parent=1 // pred_fallthru
      _
    // Predicated region
    $region34: #{tpu_custom_call.1} parent=1 // pred_check
      _
    $region35: #{tpu_custom_call.1} parent=1 // pred_check_branch
      %67 = sbr.rel (0) target = $region37
    $region36: #{tpu_custom_call.1} parent=1 // pred_region
      %69 = dma.done [#allocation7], 512
    $region37: #{tpu_custom_call.1} parent=1 // pred_fallthru
      _
    // Predicated region
    $region38: #{tpu_custom_call.1} parent=1 // pred_check
      _
    $region39: #{tpu_custom_call.1} parent=1 // pred_check_branch
      %71 = sbr.rel (0) target = $region41
    $region40: #{tpu_custom_call.1} parent=1 // pred_region
      %73 = dma.done [#allocation7], 2048
    $region41: #{tpu_custom_call.1} parent=1 // pred_fallthru
      _
    %v75 = vld [vmem:[#allocation3] sm:$0xff]
    %v76 = vpack.c.bf16 %v75, %v75
    %v77 = vld [vmem:[#allocation6] sm:$0xff]
    %v78 = vld [vmem:[#allocation6 + $0x8] sm:$0xff]
    %v79 = vld [vmem:[#allocation6 + $0x10] sm:$0xff]
    %v80 = vld [vmem:[#allocation6 + $0x18] sm:$0xff]
    %v85 = vunpack.c.l.b16 %v77
    %v86 = vunpack.c.h.b16 %v77
    %v87 = vunpack.c.l.b16 %v78
    %v88 = vunpack.c.h.b16 %v78
    %v89 = vunpack.c.l.b16 %v79
    %v90 = vunpack.c.h.b16 %v79
    %v91 = vunpack.c.l.b16 %v80
    %v92 = vunpack.c.h.b16 %v80
    %v93 = vpack.c.b16 %v87, %v85
    %v94 = vpack.c.b16 %v88, %v86
    %v95 = vpack.c.b16 %v91, %v89
    %v96 = vpack.c.b16 %v92, %v90
    %vm101 = vcmask 261120
    %v103 = vsel %vm101, %v76, 0
    %105 = vmatpush.bf16.msra.mxu0 0
    %106 = vmatpush.bf16.msra.mxu0 0
    %107 = vmatpush.bf16.msra.mxu0 0
    %108 = vmatpush.bf16.msra.mxu0 0
    %109 = vmatpush.bf16.msra.mxu0 0
    %110 = vmatpush.bf16.msra.mxu0 0
    %111 = vmatpush.bf16.msra.mxu0 %v95
    %112 = vmatpush.bf16.msra.mxu0 %v93
    %113 = vmatmul.bf16.gmra.mxu0 %v103
    %v114 = vpop.f32.mrf.mxu0
    %v115 = vadd.f32 0.0, %v114
    %v116 = vpop.f32.mrf.mxu0
    %117 = vdwg.mxu0
    %118 = vmatpush.bf16.msra.mxu0 0
    %119 = vmatpush.bf16.msra.mxu0 0
    %120 = vmatpush.bf16.msra.mxu0 0
    %121 = vmatpush.bf16.msra.mxu0 0
    %122 = vmatpush.bf16.msra.mxu0 0
    %123 = vmatpush.bf16.msra.mxu0 0
    %124 = vmatpush.bf16.msra.mxu0 %v96
    %125 = vmatpush.bf16.msra.mxu0 %v94
    %126 = vmatmul.bf16.gmra.mxu0 %v103
    %v127 = vpop.f32.mrf.mxu0
    %v128 = vadd.f32 0.0, %v127
    %v129 = vpop.f32.mrf.mxu0
    %130 = vdwg.mxu0
    %v131 = vpack.c.bf16 %v128, %v115
    %v132 = vld [vmem:[%s2] sm:$0x3]
    %134 = vst [vmem:[#allocation1] ss:$9 sm:$0xff] %v132
    %v135 = vld [vmem:[#allocation1] sm:$0xff]
    %v136 = vld [vmem:[#allocation1 + $0x9] sm:$0xff]
    %v137 = vpack.i.b16 %v135, %v135
    %v139 = vperm.slane %v137, 0
    %v140 = vpack.i.b16 %v136, %v136
    %v142 = vperm.slane %v140, 0
    %v143 = vunpack.c.l.bf16 %v131
    %v144 = vunpack.c.h.bf16 %v131
    %v145 = vunpack.c.l.bf16 %v139
    %v146 = vunpack.c.l.bf16 %v142
    %v147 = vadd.f32 %v143, %v145
    %v148 = vadd.f32 %v144, %v146
    %v149 = vpack.c.bf16 %v148, %v147
    %v150 = vunpack.c.l.bf16 %v149
    %v151 = vunpack.c.h.bf16 %v149
    %v152 = vmax.f32 %v150, 0.0
    %v153 = vmax.f32 %v151, 0.0
    %v154 = vpack.c.bf16 %v152, %v152
    %v155 = vpack.c.bf16 %v153, %v153
    %v156 = vld [vmem:[#allocation8] sm:$0xf]
    %v157 = vld [vmem:[#allocation8 + $0x4] sm:$0xf]
    %v158 = vld [vmem:[#allocation8 + $0x8] sm:$0xf]
    %v159 = vld [vmem:[#allocation8 + $0xc] sm:$0xf]
    %v160 = vld [vmem:[#allocation8 + $0x10] sm:$0xf]
    %v161 = vld [vmem:[#allocation8 + $0x14] sm:$0xf]
    %v162 = vld [vmem:[#allocation8 + $0x18] sm:$0xf]
    %v163 = vld [vmem:[#allocation8 + $0x1c] sm:$0xf]
    %v164 = vld [vmem:[#allocation8 + $0x20] sm:$0xf]
    %v165 = vld [vmem:[#allocation8 + $0x24] sm:$0xf]
    %v166 = vld [vmem:[#allocation8 + $0x28] sm:$0xf]
    %v167 = vld [vmem:[#allocation8 + $0x2c] sm:$0xf]
    %v168 = vld [vmem:[#allocation8 + $0x30] sm:$0xf]
    %v169 = vld [vmem:[#allocation8 + $0x34] sm:$0xf]
    %v170 = vld [vmem:[#allocation8 + $0x38] sm:$0xf]
    %v171 = vld [vmem:[#allocation8 + $0x3c] sm:$0xf]
    %v172 = vld [vmem:[#allocation8 + $0x40] sm:$0xf]
    %v173 = vld [vmem:[#allocation8 + $0x44] sm:$0xf]
    %v174 = vld [vmem:[#allocation8 + $0x48] sm:$0xf]
    %v175 = vld [vmem:[#allocation8 + $0x4c] sm:$0xf]
    %v176 = vld [vmem:[#allocation8 + $0x50] sm:$0xf]
    %v177 = vld [vmem:[#allocation8 + $0x54] sm:$0xf]
    %v178 = vld [vmem:[#allocation8 + $0x58] sm:$0xf]
    %v179 = vld [vmem:[#allocation8 + $0x5c] sm:$0xf]
    %v180 = vld [vmem:[#allocation8 + $0x60] sm:$0xf]
    %v181 = vld [vmem:[#allocation8 + $0x64] sm:$0xf]
    %v182 = vld [vmem:[#allocation8 + $0x68] sm:$0xf]
    %v183 = vld [vmem:[#allocation8 + $0x6c] sm:$0xf]
    %v184 = vld [vmem:[#allocation8 + $0x70] sm:$0xf]
    %v185 = vld [vmem:[#allocation8 + $0x74] sm:$0xf]
    %v186 = vld [vmem:[#allocation8 + $0x78] sm:$0xf]
    %v187 = vld [vmem:[#allocation8 + $0x7c] sm:$0xf]
    %v220 = vunpack.c.l.b16 %v156
    %v221 = vunpack.c.l.b16 %v157
    %v222 = vunpack.c.l.b16 %v158
    %v223 = vunpack.c.l.b16 %v159
    %v224 = vunpack.c.l.b16 %v160
    %v225 = vunpack.c.l.b16 %v161
    %v226 = vunpack.c.l.b16 %v162
    %v227 = vunpack.c.l.b16 %v163
    %v228 = vunpack.c.l.b16 %v164
    %v229 = vunpack.c.l.b16 %v165
    %v230 = vunpack.c.l.b16 %v166
    %v231 = vunpack.c.l.b16 %v167
    %v232 = vunpack.c.l.b16 %v168
    %v233 = vunpack.c.l.b16 %v169
    %v234 = vunpack.c.l.b16 %v170
    %v235 = vunpack.c.l.b16 %v171
    %v236 = vunpack.c.l.b16 %v172
    %v237 = vunpack.c.l.b16 %v173
    %v238 = vunpack.c.l.b16 %v174
    %v239 = vunpack.c.l.b16 %v175
    %v240 = vunpack.c.l.b16 %v176
    %v241 = vunpack.c.l.b16 %v177
    %v242 = vunpack.c.l.b16 %v178
    %v243 = vunpack.c.l.b16 %v179
    %v244 = vunpack.c.l.b16 %v180
    %v245 = vunpack.c.l.b16 %v181
    %v246 = vunpack.c.l.b16 %v182
    %v247 = vunpack.c.l.b16 %v183
    %v248 = vunpack.c.l.b16 %v184
    %v249 = vunpack.c.l.b16 %v185
    %v250 = vunpack.c.l.b16 %v186
    %v251 = vunpack.c.l.b16 %v187
    %v252 = vpack.c.b16 %v221, %v220
    %v253 = vpack.c.b16 %v223, %v222
    %v254 = vpack.c.b16 %v225, %v224
    %v255 = vpack.c.b16 %v227, %v226
    %v256 = vpack.c.b16 %v229, %v228
    %v257 = vpack.c.b16 %v231, %v230
    %v258 = vpack.c.b16 %v233, %v232
    %v259 = vpack.c.b16 %v235, %v234
    %v260 = vpack.c.b16 %v237, %v236
    %v261 = vpack.c.b16 %v239, %v238
    %v262 = vpack.c.b16 %v241, %v240
    %v263 = vpack.c.b16 %v243, %v242
    %v264 = vpack.c.b16 %v245, %v244
    %v265 = vpack.c.b16 %v247, %v246
    %v266 = vpack.c.b16 %v249, %v248
    %v267 = vpack.c.b16 %v251, %v250
    %284 = vmatpush.bf16.msra.mxu0 %v259
    %285 = vmatpush.bf16.msra.mxu0 %v258
    %286 = vmatpush.bf16.msra.mxu0 %v257
    %287 = vmatpush.bf16.msra.mxu0 %v256
    %288 = vmatpush.bf16.msra.mxu0 %v255
    %289 = vmatpush.bf16.msra.mxu0 %v254
    %290 = vmatpush.bf16.msra.mxu0 %v253
    %291 = vmatpush.bf16.msra.mxu0 %v252
    %292 = vmatmul.bf16.gmra.mxu0 %v154
    %v293 = vpop.f32.mrf.mxu0
    %v294 = vadd.f32 0.0, %v293
    %v295 = vpop.f32.mrf.mxu0
    %296 = vdwg.mxu0
    %297 = vmatpush.bf16.msra.mxu0 %v267
    %298 = vmatpush.bf16.msra.mxu0 %v266
    %299 = vmatpush.bf16.msra.mxu0 %v265
    %300 = vmatpush.bf16.msra.mxu0 %v264
    %301 = vmatpush.bf16.msra.mxu0 %v263
    %302 = vmatpush.bf16.msra.mxu0 %v262
    %303 = vmatpush.bf16.msra.mxu0 %v261
    %304 = vmatpush.bf16.msra.mxu0 %v260
    %305 = vmatmul.bf16.gmra.mxu0 %v155
    %v306 = vpop.f32.mrf.mxu0
    %v307 = vadd.f32 %v294, %v306
    %v308 = vpop.f32.mrf.mxu0
    %309 = vdwg.mxu0
    %v310 = vpack.c.bf16 %v307, %v307
    %v311 = vld [vmem:[%s4] sm:$0x1]
    %v313 = vpack.i.b16 %v311, %v311
    %v315 = vperm.slane %v313, 0
    %v316 = vunpack.c.l.bf16 %v310
    %v317 = vunpack.c.l.bf16 %v315
    %v318 = vadd.f32 %v316, %v317
    %v319 = vpack.c.bf16 %v318, %v318
    %v320 = vunpack.c.l.bf16 %v319
    %v321 = vmax.f32 %v320, 0.0
    %v322 = vpack.c.bf16 %v321, %v321
    %v323 = vld [vmem:[%s5] sm:$0x1]
    %v324 = vld [vmem:[#allocation2] sm:$0x1]
    %326 = vset.pattern.permute.xlu0 0
    %327 = vperm.xlu0 %326, %v324
    %v328 = vpop.permute.xlu0 %327
    %v330 = vperm.slane %v328, 0
    %331 = vmatpush.bf16.xpose.msra.mxu0 0
    %332 = vmatpush.bf16.xpose.msra.mxu0 0
    %333 = vmatpush.bf16.xpose.msra.mxu0 0
    %334 = vmatpush.bf16.xpose.msra.mxu0 0
    %335 = vmatpush.bf16.xpose.msra.mxu0 0
    %336 = vmatpush.bf16.xpose.msra.mxu0 0
    %337 = vmatpush.bf16.xpose.msra.mxu0 0
    %338 = vmatpush.bf16.xpose.msra.mxu0 %v322
    %339 = vmatmul.bf16.gmra.mxu0 %v323
    %v340 = vpop.f32.mrf.mxu0
    %v341 = vadd.f32 %v330, %v340
    %v342 = vpop.f32.mrf.mxu0
    %343 = vdwg.mxu0
    %vm344 = vcmask 57344
    %345 = vst.msk [vmem:[#allocation9] sm:$0x1] %vm344, %v341
    // Predicated region
    $region42: #{tpu_custom_call.1} parent=1 // pred_check
      _
    $region43: #{tpu_custom_call.1} parent=1 // pred_check_branch
      %347 = sbr.rel (0) target = $region45
    $region44: #{tpu_custom_call.1} parent=1 // pred_region
      %349 = vsyncadd [#allocation5], 0
      %s351 = sshll.u32 [#allocation9], 4
      %s352 = int_to_ptr.vmem [resolvable:$true] %s351
      %s353 = sshll.u32 %s7, 4
      %s354 = int_to_ptr.hbm [resolvable:$true] %s353
      %356 = dma.vmem_to_hbm [thread:$0]  %s352, 16, %s354, [#allocation5]
    $region45: #{tpu_custom_call.1} parent=1 // pred_fallthru
      _
    // Predicated region
    $region46: #{tpu_custom_call.1} parent=1 // pred_check
      _
    $region47: #{tpu_custom_call.1} parent=1 // pred_check_branch
      %358 = sbr.rel (0) target = $region49
    $region48: #{tpu_custom_call.1} parent=1 // pred_region
      %360 = dma.done [#allocation5], 16
    $region49: #{tpu_custom_call.1} parent=1 // pred_fallthru
      _
    %361 = vsyncpa [#allocation4], 1
    %362 = vsyncpa [#allocation7], 1
    %363 = vsyncpa [#allocation5], 1

</llo_original>
